<compile_context>
chip_gen: v7x
topology: tpu7x:2x2x1
jax: 0.10.0
libtpu: 0.0.40
codegen_flags: <defaults>
</compile_context>

<pallas_src>
import jax
import jax.numpy as jnp
from jax.experimental import pallas as pl
from jax.experimental.pallas import tpu as pltpu


def _scale_kernel(x_ref, s_ref, o_ref):
    # x_ref: (R, Cb) in VMEM, s_ref: (1, Cb) in VMEM -> lane-wise VPU multiply,
    # broadcast over sublanes. No transpose, no masked stores.
    o_ref[...] = x_ref[...] * s_ref[...]


def permute_mul(x_nhwc: jax.Array, scale_c: jax.Array) -> jax.Array:
    """x_nhwc: [N, H, W, C] float32; scale_c: [C] float32 -> [N, C, H, W]."""
    N, H, W, C = x_nhwc.shape
    R = N * H * W

    # Flatten to a lane-dense 2-D slab: rows on sublanes, channels on lanes.
    x2d = x_nhwc.reshape(R, C)
    s2d = scale_c.reshape(1, C).astype(x_nhwc.dtype)

    # Lane-aligned channel blocking (C = 384 -> 3 blocks of 128).
    block_c = 128 if C % 128 == 0 else C
    grid = (C // block_c,)

    itemsize = jnp.dtype(x_nhwc.dtype).itemsize
    cost = pl.CostEstimate(
        flops=R * C,
        transcendentals=0,
        bytes_accessed=(2 * R * C + C) * itemsize,
    )

    y2d = pl.pallas_call(
        _scale_kernel,
        out_shape=jax.ShapeDtypeStruct((R, C), x_nhwc.dtype),
        grid=grid,
        in_specs=[
            pl.BlockSpec((R, block_c), lambda j: (0, j)),
            pl.BlockSpec((1, block_c), lambda j: (0, j)),
        ],
        out_specs=pl.BlockSpec((R, block_c), lambda j: (0, j)),
        compiler_params=pltpu.CompilerParams(
            dimension_semantics=("parallel",),
        ),
        cost_estimate=cost,
    )(x2d, s2d)

    # NHWC -> NCHW permute outside the kernel (module semantics preserved).
    # TODO(synk): ideally the consumer accepts NHWC (or this op is fused into a
    # neighboring kernel's epilogue); a standalone ~600 KB op is launch-bound.
    return jnp.transpose(y2d.reshape(N, H, W, C), (0, 3, 1, 2))


if __name__ == "__main__":
    key = jax.random.PRNGKey(0)
    kx, ks = jax.random.split(key)

    # Shapes implied by the module: x157 = [1, 14, 14, 384], layer_scale12 = [384, 1, 1]
    N, H, W, C = 1, 14, 14, 384
    x157 = jax.random.normal(kx, (N, H, W, C), dtype=jnp.float32)
    # torch.rand -> uniform [0, 1); stored logically as [C, 1, 1], kept as a C vector.
    layer_scale12 = jax.random.uniform(ks, (C,), dtype=jnp.float32)

    out = permute_mul(x157, layer_scale12)
    out = jax.block_until_ready(out)

    # Reference check (plain JAX): permute then broadcast-multiply.
    ref = layer_scale12.reshape(1, C, 1, 1) * jnp.transpose(x157, (0, 3, 1, 2))
    assert out.shape == (N, C, H, W)
    assert jnp.allclose(out, ref, atol=1e-6, rtol=1e-6)

    print("KERNEL_OK")
</pallas_src>

<mosaic_0001>
module attributes {stable_mosaic.version = 11 : i64} {
  func.func @_scale_kernel(%arg0: i32, %arg1: memref<196x128xf32, #tpu.memory_space<vmem>>, %arg2: memref<1x128xf32, #tpu.memory_space<vmem>>, %arg3: memref<196x128xf32, #tpu.memory_space<vmem>>) attributes {dimension_semantics = [#tpu.dimension_semantics<parallel>], iteration_bounds = array<i64: 3>, scalar_prefetch = 0 : i64, scratch_operands = 0 : i64, tpu.core_type = #tpu.core_type<tc>, window_params = [{transform_indices = @transform_0, window_bounds = array<i64: 196, 128>}, {transform_indices = @transform_1, window_bounds = array<i64: 1, 128>}, {transform_indices = @transform_2, window_bounds = array<i64: 196, 128>}]} {
    %c0 = arith.constant 0 : index
    %c0_0 = arith.constant 0 : index
    %0 = vector.load %arg1[%c0, %c0_0] : memref<196x128xf32, #tpu.memory_space<vmem>>, vector<196x128xf32>
    %c0_1 = arith.constant 0 : index
    %c0_2 = arith.constant 0 : index
    %1 = vector.load %arg2[%c0_1, %c0_2] : memref<1x128xf32, #tpu.memory_space<vmem>>, vector<1x128xf32>
    %2 = vector.broadcast %1 : vector<1x128xf32> to vector<196x128xf32>
    %3 = arith.mulf %0, %2 : vector<196x128xf32>
    %c0_3 = arith.constant 0 : index
    %c0_4 = arith.constant 0 : index
    %4 = vector.load %arg3[%c0_3, %c0_4] : memref<196x128xf32, #tpu.memory_space<vmem>>, vector<196x128xf32>
    tpu.vector_store %arg3[%c0_3, %c0_4], %3 {strides = array<i32>} : memref<196x128xf32, #tpu.memory_space<vmem>>, vector<196x128xf32>,
    return
  }
  func.func @transform_0(%arg0: i32) -> (i32, i32) {
    %c0_i32 = arith.constant 0 : i32
    %c0_i32_0 = arith.constant 0 : i32
    return %c0_i32, %arg0 : i32, i32
  }
  func.func @transform_1(%arg0: i32) -> (i32, i32) {
    %c0_i32 = arith.constant 0 : i32
    %c0_i32_0 = arith.constant 0 : i32
    return %c0_i32, %arg0 : i32, i32
  }
  func.func @transform_2(%arg0: i32) -> (i32, i32) {
    %c0_i32 = arith.constant 0 : i32
    %c0_i32_0 = arith.constant 0 : i32
    return %c0_i32, %arg0 : i32, i32
  }
}

</mosaic_0001>

<llo_original>
// kernel: tpu_custom_call.1
$region0: #{tpu_custom_call.1}
  #allocation0 [shape = 'u32[]', space=smem, size = 0x4, offset = 0x4, fixed_abs, tag = 'smem constant byte address 0x4 - core index']
  #allocation1 [shape = 'u32[144,128]{1,0:T(1,128)}', space=vmem, size = 0x12000, scoped, tag = 'internal scratch']
  %s0 = inlined_call_operand.hbm [shape: f32[196,384], index: 0, kind: input, shape index: {}]
  %s1 = inlined_call_operand.vmem [shape: f32[1,384], index: 1, kind: input, shape index: {}]
  %s2 = inlined_call_operand.hbm [shape: f32[196,384], index: 2, kind: output, shape index: {}]
  %s3 = sld [smem:[#allocation0]]
  $region45: #{tpu_custom_call.1} parent=0
    _
  %s5 = ssub.s32 1, %s3
  %s6 = scalar_select 0, %s5, %s3
  $region1: #{tpu_custom_call.1} parent=0
    #allocation2 [shape = 'u8[204800]{0}', space=vmem, size = 0x32000, scoped, tag = 'input window, operand 0']
    #allocation3 [shape = 's32[2]{0}', space=sflag, size = 0x8, scoped, tag = 'scoped memory for tpu_custom_call.1']
    #allocation4 [shape = 's32[2]{0}', space=sflag, size = 0x8, scoped, tag = 'scoped memory for tpu_custom_call.1']
    #allocation5 [shape = 'u8[204800]{0}', space=vmem, size = 0x32000, scoped, tag = 'output window, operand 0']
    %7 = vsyncpa [#allocation3], 0
    %s8 = scalar_lea.sflag [#allocation3], 1
    %9 = vsyncpa %s8, 0
    %10 = vsyncpa [#allocation4], 0
    %s11 = scalar_lea.sflag [#allocation4], 1
    %12 = vsyncpa %s11, 0
    loop: start=0, step=1, limit=5
    $region2: #{tpu_custom_call.1} parent=1 // loop_pre_header
      _
    $region3: #{tpu_custom_call.1} parent=1 // loop_header
      %s14 = sphi 0, %s18
      %p15 = scmp.ge.s32.totalorder %s14, 5
      %s24 = sphi 0, %s26
      %s27 = sphi 0, %s24
      %s28 = sphi 0, %s27
      %s44 = sphi 0, %s28
      %s50 = sphi 0, %s52
      %s53 = sphi 0, %s50
      %s54 = sphi 0, %s53
      %s70 = sphi 0, %s54
      %s76 = sphi 0, %s78
      %s79 = sphi 0, %s76
      %s80 = sphi 0, %s79
      %s96 = sphi 0, %s80
    $region4: #{tpu_custom_call.1} parent=1 // loop_header_branch
      %17 = sbr.rel (%p15) target = $region8
    $region5: #{tpu_custom_call.1} parent=1 // loop_body
      %s19 = ssub.s32 %s14, 1
      %s20 = ssub.s32 %s14, 2
      %s21 = sadd.s32 %s14, 1
      %s22 = ssub.s32 %s14, %s21
      %p23 = scmp.eq.s32.totalorder %s22, 0
      %s25 = sadd.s32 %s24, 1
      %s26 = scalar_select %p23, %s24, %s25
      %p29 = pneg %p23
      %p30 = scmp.eq.s32.totalorder %s14, 2
      %p31 = por %p29, %p30
      %p32 = scmp.ne.s32.totalorder %s24, %s27
      %p33 = scmp.eq.s32.totalorder %s14, 0
      %p34 = por %p32, %p33
      %p35 = scmp.ne.s32.totalorder %s24, %s27
      %p36 = scmp.eq.s32.totalorder %s19, 2
      %p37 = por %p35, %p36
      %p38 = scmp.ne.s32.totalorder %s27, %s28
      %p39 = scmp.eq.s32.totalorder %s19, 0
      %p40 = por %p38, %p39
      %p41 = scmp.ne.s32.totalorder %s27, %s28
      %p42 = scmp.eq.s32.totalorder %s20, 2
      %p43 = por %p41, %p42
      %p45 = scmp.ne.s32.totalorder %s28, %s44
      %p46 = scmp.eq.s32.totalorder %s20, 0
      %p47 = por %p45, %p46
      %s48 = ssub.s32 %s14, %s21
      %p49 = scmp.eq.s32.totalorder %s48, 0
      %s51 = sadd.s32 %s50, 1
      %s52 = scalar_select %p49, %s50, %s51
      %p55 = pneg %p49
      %p56 = scmp.eq.s32.totalorder %s14, 2
      %p57 = por %p55, %p56
      %p58 = scmp.ne.s32.totalorder %s50, %s53
      %p59 = scmp.eq.s32.totalorder %s14, 0
      %p60 = por %p58, %p59
      %p61 = scmp.ne.s32.totalorder %s50, %s53
      %p62 = scmp.eq.s32.totalorder %s19, 2
      %p63 = por %p61, %p62
      %p64 = scmp.ne.s32.totalorder %s53, %s54
      %p65 = scmp.eq.s32.totalorder %s19, 0
      %p66 = por %p64, %p65
      %p67 = scmp.ne.s32.totalorder %s53, %s54
      %p68 = scmp.eq.s32.totalorder %s20, 2
      %p69 = por %p67, %p68
      %p71 = scmp.ne.s32.totalorder %s54, %s70
      %p72 = scmp.eq.s32.totalorder %s20, 0
      %p73 = por %p71, %p72
      %s74 = ssub.s32 %s14, %s21
      %p75 = scmp.eq.s32.totalorder %s74, 0
      %s77 = sadd.s32 %s76, 1
      %s78 = scalar_select %p75, %s76, %s77
      %p81 = pneg %p75
      %p82 = scmp.eq.s32.totalorder %s14, 2
      %p83 = por %p81, %p82
      %p84 = scmp.ne.s32.totalorder %s76, %s79
      %p85 = scmp.eq.s32.totalorder %s14, 0
      %p86 = por %p84, %p85
      %p87 = scmp.ne.s32.totalorder %s76, %s79
      %p88 = scmp.eq.s32.totalorder %s19, 2
      %p89 = por %p87, %p88
      %p90 = scmp.ne.s32.totalorder %s79, %s80
      %p91 = scmp.eq.s32.totalorder %s19, 0
      %p92 = por %p90, %p91
      %p93 = scmp.ne.s32.totalorder %s79, %s80
      %p94 = scmp.eq.s32.totalorder %s20, 2
      %p95 = por %p93, %p94
      %p97 = scmp.ne.s32.totalorder %s80, %s96
      %p98 = scmp.eq.s32.totalorder %s20, 0
      %p99 = por %p97, %p98
      %p100 = scmp.le.s32.totalorder 1, %s14
      %p101 = scmp.lt.s32.totalorder %s14, 4
      %p102 = pnand %p100, %p101
      %p103 = pneg %p102
      // Predicated region
      $region9: #{tpu_custom_call.1} parent=5 // pred_check
        _
      $region10: #{tpu_custom_call.1} parent=5 // pred_check_branch
        %105 = sbr.rel (%p102) target = $region12
      $region11: #{tpu_custom_call.1} parent=5 // pred_region
        %s106 = ssub.s32 %s14, 1
      $region12: #{tpu_custom_call.1} parent=5 // pred_fallthru
        _
      %p107 = scmp.lt.s32.totalorder %s14, 3
      // Predicated region
      $region13: #{tpu_custom_call.1} parent=5 // pred_check
        %p108 = pneg %p107
      $region14: #{tpu_custom_call.1} parent=5 // pred_check_branch
        %110 = sbr.rel (%p108) target = $region16
      $region15: #{tpu_custom_call.1} parent=5 // pred_region
        // Predicated region
        $region17: #{tpu_custom_call.1} parent=15 // pred_check
          %p111 = pneg %p34
        $region18: #{tpu_custom_call.1} parent=15 // pred_check_branch
          %113 = sbr.rel (%p111) target = $region20
        $region19: #{tpu_custom_call.1} parent=15 // pred_region
          %s114 = sand.u32 %s24, 1
          %s115 = scalar_lea.sflag [#allocation3], %s114
          %s116 = sand.u32 %s24, 1
          %s117 = smul.addr %s116, 200
          %s118 = scalar_lea.vmem [#allocation2], %s117
          %s120 = ssub.s32 3200, 3200
          %121 = vsyncadd %s115, %s120
          %s122 = smul.addr %s14, 128
          %s123 = scalar_lea.hbm %s0, %s122
          %s124 = sshll.u32 %s118, 4
          %s125 = int_to_ptr.vmem [resolvable:$true] %s124
          %130 = dma.hbm_to_vmem [thread:$0]  %s123, 3200, %s125, %s115, 384, 128, 8
        $region20: #{tpu_custom_call.1} parent=15 // pred_fallthru
          _
        // Predicated region
        $region21: #{tpu_custom_call.1} parent=15 // pred_check
          %p131 = pneg %p60
        $region22: #{tpu_custom_call.1} parent=15 // pred_check_branch
          %133 = sbr.rel (%p131) target = $region24
        $region23: #{tpu_custom_call.1} parent=15 // pred_region
          %p134 = scmp.lt.s32.totalorder %s14, 2
          %s135 = scalar_select %p134, %s14, 2
          %s136 = scalar_lea.vmem %s1, %s135
        $region24: #{tpu_custom_call.1} parent=15 // pred_fallthru
          _
      $region16: #{tpu_custom_call.1} parent=5 // pred_fallthru
        _
      %p137 = scmp.le.s32.totalorder 1, %s14
      %p138 = scmp.lt.s32.totalorder %s14, 4
      %p139 = pnand %p137, %p138
      %p140 = pneg %p139
      // Predicated region
      $region25: #{tpu_custom_call.1} parent=5 // pred_check
        _
      $region26: #{tpu_custom_call.1} parent=5 // pred_check_branch
        %142 = sbr.rel (%p139) target = $region28
      $region27: #{tpu_custom_call.1} parent=5 // pred_region
        %s143 = ssub.s32 %s14, 1
        %s144 = sand.u32 %s27, 1
        %s145 = scalar_lea.sflag [#allocation3], %s144
        %s146 = sand.u32 %s27, 1
        %s147 = smul.addr %s146, 200
        %s148 = scalar_lea.vmem [#allocation2], %s147
        // Predicated region
        $region29: #{tpu_custom_call.1} parent=27 // pred_check
          %p149 = pneg %p40
        $region30: #{tpu_custom_call.1} parent=27 // pred_check_branch
          %151 = sbr.rel (%p149) target = $region32
        $region31: #{tpu_custom_call.1} parent=27 // pred_region
          %152 = dma.done %s145, 3200
        $region32: #{tpu_custom_call.1} parent=27 // pred_fallthru
          _
        %s153 = sand.u32 %s27, 1
        %s154 = scalar_lea.sflag [#allocation3], %s153
        %s155 = sand.u32 %s27, 1
        %s156 = smul.addr %s155, 200
        %s157 = scalar_lea.vmem [#allocation2], %s156
        %p158 = pneg %p40
        %p159 = pneg %p37
        %p160 = scmp.lt.s32.totalorder %s19, 2
        %s161 = scalar_select %p160, %s19, 2
        %s162 = scalar_lea.vmem %s1, %s161
        %p163 = pneg %p66
        %p164 = pneg %p63
        %p165 = pneg %p92
        %p166 = pneg %p89
        %s167 = sand.u32 %s79, 1
        %s168 = scalar_lea.sflag [#allocation4], %s167
        %s169 = sand.u32 %s79, 1
        %s170 = smul.addr %s169, 200
        %s171 = scalar_lea.vmem [#allocation5], %s170
        %p172 = scmp.lt.s32.totalorder %s19, 2
        %s173 = scalar_select %p172, %s19, 2
        %s174 = scalar_lea.vmem %s1, %s173
        %v175 = vld [vmem:[%s148] sm:$0xff]
        %v176 = vld [vmem:[%s148 + $0x8] sm:$0xff]
        %v177 = vld [vmem:[%s148 + $0x10] sm:$0xff]
        %v178 = vld [vmem:[%s148 + $0x18] sm:$0xff]
        %v179 = vld [vmem:[%s148 + $0x20] sm:$0xff]
        %v180 = vld [vmem:[%s148 + $0x28] sm:$0xff]
        %v181 = vld [vmem:[%s148 + $0x30] sm:$0xff]
        %v182 = vld [vmem:[%s148 + $0x38] sm:$0xff]
        %v183 = vld [vmem:[%s148 + $0x40] sm:$0xff]
        %v184 = vld [vmem:[%s148 + $0x48] sm:$0xff]
        %v185 = vld [vmem:[%s148 + $0x50] sm:$0xff]
        %v186 = vld [vmem:[%s148 + $0x58] sm:$0xff]
        %v187 = vld [vmem:[%s148 + $0x60] sm:$0xff]
        %v188 = vld [vmem:[%s148 + $0x68] sm:$0xff]
        %v189 = vld [vmem:[%s148 + $0x70] sm:$0xff]
        %v190 = vld [vmem:[%s148 + $0x78] sm:$0xff]
        %v191 = vld [vmem:[%s148 + $0x80] sm:$0xff]
        %v192 = vld [vmem:[%s148 + $0x88] sm:$0xff]
        %v193 = vld [vmem:[%s148 + $0x90] sm:$0xff]
        %v194 = vld [vmem:[%s148 + $0x98] sm:$0xff]
        %v195 = vld [vmem:[%s148 + $0xa0] sm:$0xff]
        %v196 = vld [vmem:[%s148 + $0xa8] sm:$0xff]
        %v197 = vld [vmem:[%s148 + $0xb0] sm:$0xff]
        %v198 = vld [vmem:[%s148 + $0xb8] sm:$0xff]
        %v199 = vld [vmem:[%s148 + $0xc0] sm:$0xf]
        %v200 = vld [vmem:[%s174] sm:$0x1]
        %v202 = vlaneseq
        %v203 = vshrl.u32 %v202, 7
        %v204 = vsub.s32 0, %v203
        %v205 = vrot.slane %v200, %v204
        %v207 = vmul.f32 %v175, %v205
        %v208 = vmul.f32 %v176, %v205
        %v209 = vmul.f32 %v177, %v205
        %v210 = vmul.f32 %v178, %v205
        %v211 = vmul.f32 %v179, %v205
        %v212 = vmul.f32 %v180, %v205
        %v213 = vmul.f32 %v181, %v205
        %v214 = vmul.f32 %v182, %v205
        %v215 = vmul.f32 %v183, %v205
        %v216 = vmul.f32 %v184, %v205
        %v217 = vmul.f32 %v185, %v205
        %v218 = vmul.f32 %v186, %v205
        %v219 = vmul.f32 %v187, %v205
        %v220 = vmul.f32 %v188, %v205
        %v221 = vmul.f32 %v189, %v205
        %v222 = vmul.f32 %v190, %v205
        %v223 = vmul.f32 %v191, %v205
        %v224 = vmul.f32 %v192, %v205
        %v225 = vmul.f32 %v193, %v205
        %v226 = vmul.f32 %v194, %v205
        %v227 = vmul.f32 %v195, %v205
        %v228 = vmul.f32 %v196, %v205
        %v229 = vmul.f32 %v197, %v205
        %v230 = vmul.f32 %v198, %v205
        %v231 = vmul.f32 %v199, %v205
        %232 = vst [vmem:[%s171] sm:$0xff] %v207
        %233 = vst [vmem:[%s171 + $0x8] sm:$0xff] %v208
        %234 = vst [vmem:[%s171 + $0x10] sm:$0xff] %v209
        %235 = vst [vmem:[%s171 + $0x18] sm:$0xff] %v210
        %236 = vst [vmem:[%s171 + $0x20] sm:$0xff] %v211
        %237 = vst [vmem:[%s171 + $0x28] sm:$0xff] %v212
        %238 = vst [vmem:[%s171 + $0x30] sm:$0xff] %v213
        %239 = vst [vmem:[%s171 + $0x38] sm:$0xff] %v214
        %240 = vst [vmem:[%s171 + $0x40] sm:$0xff] %v215
        %241 = vst [vmem:[%s171 + $0x48] sm:$0xff] %v216
        %242 = vst [vmem:[%s171 + $0x50] sm:$0xff] %v217
        %243 = vst [vmem:[%s171 + $0x58] sm:$0xff] %v218
        %244 = vst [vmem:[%s171 + $0x60] sm:$0xff] %v219
        %245 = vst [vmem:[%s171 + $0x68] sm:$0xff] %v220
        %246 = vst [vmem:[%s171 + $0x70] sm:$0xff] %v221
        %247 = vst [vmem:[%s171 + $0x78] sm:$0xff] %v222
        %248 = vst [vmem:[%s171 + $0x80] sm:$0xff] %v223
        %249 = vst [vmem:[%s171 + $0x88] sm:$0xff] %v224
        %250 = vst [vmem:[%s171 + $0x90] sm:$0xff] %v225
        %251 = vst [vmem:[%s171 + $0x98] sm:$0xff] %v226
        %252 = vst [vmem:[%s171 + $0xa0] sm:$0xff] %v227
        %253 = vst [vmem:[%s171 + $0xa8] sm:$0xff] %v228
        %254 = vst [vmem:[%s171 + $0xb0] sm:$0xff] %v229
        %255 = vst [vmem:[%s171 + $0xb8] sm:$0xff] %v230
        %256 = vst [vmem:[%s171 + $0xc0] sm:$0xf] %v231
        %s257 = sand.u32 %s79, 1
        %s258 = scalar_lea.sflag [#allocation4], %s257
        %s259 = sand.u32 %s79, 1
        %s260 = smul.addr %s259, 200
        %s261 = scalar_lea.vmem [#allocation5], %s260
        // Predicated region
        $region33: #{tpu_custom_call.1} parent=27 // pred_check
          %p262 = pneg %p89
        $region34: #{tpu_custom_call.1} parent=27 // pred_check_branch
          %264 = sbr.rel (%p262) target = $region36
        $region35: #{tpu_custom_call.1} parent=27 // pred_region
          %s266 = ssub.s32 3200, 3200
          %267 = vsyncadd %s258, %s266
          %s268 = smul.addr %s19, 128
          %s269 = scalar_lea.hbm %s2, %s268
          %s270 = sshll.u32 %s261, 4
          %s271 = int_to_ptr.vmem [resolvable:$true] %s270
          %276 = dma.vmem_to_hbm [thread:$0]  %s271, 3200, %s269, %s258, 128, 384, 8
        $region36: #{tpu_custom_call.1} parent=27 // pred_fallthru
          _
      $region28: #{tpu_custom_call.1} parent=5 // pred_fallthru
        _
      %p277 = scmp.le.s32.totalorder 2, %s14
      // Predicated region
      $region37: #{tpu_custom_call.1} parent=5 // pred_check
        %p278 = pneg %p277
      $region38: #{tpu_custom_call.1} parent=5 // pred_check_branch
        %280 = sbr.rel (%p278) target = $region40
      $region39: #{tpu_custom_call.1} parent=5 // pred_region
        %s281 = ssub.s32 %s14, 2
        // Predicated region
        $region41: #{tpu_custom_call.1} parent=39 // pred_check
          %p282 = pneg %p95
        $region42: #{tpu_custom_call.1} parent=39 // pred_check_branch
          %284 = sbr.rel (%p282) target = $region44
        $region43: #{tpu_custom_call.1} parent=39 // pred_region
          %s285 = sand.u32 %s80, 1
          %s286 = scalar_lea.sflag [#allocation4], %s285
          %s287 = sand.u32 %s80, 1
          %s288 = smul.addr %s287, 200
          %s289 = scalar_lea.vmem [#allocation5], %s288
          %290 = dma.done %s286, 3200
        $region44: #{tpu_custom_call.1} parent=39 // pred_fallthru
          _
      $region40: #{tpu_custom_call.1} parent=5 // pred_fallthru
        _
    $region6: #{tpu_custom_call.1} parent=1 // loop_footer
      %s18 = sadd.s32 1, %s14
    $region7: #{tpu_custom_call.1} parent=1 // loop_footer_branch
      %13 = sbr.rel target = $region3
    $region8: #{tpu_custom_call.1} parent=1 // loop_exit
      _
    %291 = vsyncpa [#allocation3], 1
    %s292 = scalar_lea.sflag [#allocation3], 1
    %293 = vsyncpa %s292, 1
    %294 = vsyncpa [#allocation4], 1
    %s295 = scalar_lea.sflag [#allocation4], 1
    %296 = vsyncpa %s295, 1

</llo_original>
